<compile_context>
chip_gen: v5e
topology: v5e:2x2
jax: 0.10.0
libtpu: 0.0.40
codegen_flags: <defaults>
</compile_context>

<pallas_src>
import jax
import jax.numpy as jnp
from jax.experimental import pallas as pl
from jax.experimental.pallas import tpu as pltpu


def _round_up(x, m):
    return ((x + m - 1) // m) * m


def _cdiv(a, b):
    return -(-a // b)


def _vmem_capacity_bytes():
    try:
        return int(pltpu.get_tpu_info().vmem_capacity_bytes)
    except Exception:
        return 64 << 20  # conservative fallback (v7x-sized)


def _vmem_budget_bytes():
    cap = _vmem_capacity_bytes()
    if cap >= (96 << 20):                    # v5e / v6e: 128 MiB physical
        return 100 << 20
    return min(48 << 20, (cap * 3) // 4)     # v7x (64 MiB) or unknown: leave headroom


def _pad_cast(a, shape, dtype):
    """Pad with zeros / cast only if needed (avoids copies of already-conforming arrays)."""
    a = jnp.asarray(a)
    dtype = jnp.dtype(dtype)
    if tuple(a.shape) == tuple(shape) and a.dtype == dtype:
        return a
    out = jnp.zeros(shape, dtype)
    idx = tuple(slice(0, s) for s in a.shape)
    return out.at[idx].set(a.astype(dtype))


# --------------------------------------------------------------------------------------
# Kernels
# --------------------------------------------------------------------------------------
def _hidden_kernel(x_ref, w1_ref, b1_ref, h_ref):
    # hidden = tanh(first_bias + x @ W1), f32 accumulation, stored in compute dtype.
    acc = jnp.dot(x_ref[...], w1_ref[...], preferred_element_type=jnp.float32)
    h_ref[...] = jnp.tanh(acc + b1_ref[...]).astype(h_ref.dtype)


def _out_tile_kernel(h_ref, w2_ref, b2_ref, o_ref):
    # out[:, tile] = hidden @ W2[:, tile] + b2[tile]  -- lane-dense (multiple-of-128) store.
    acc = jnp.dot(h_ref[...], w2_ref[...], preferred_element_type=jnp.float32)
    o_ref[...] = (acc + b2_ref[...]).astype(o_ref.dtype)


# --------------------------------------------------------------------------------------
# One-time weight preparation (hoisted out of the forward path)
# --------------------------------------------------------------------------------------
def prepare_hypernet(w1, b1, w2, b2, param_sizes, *, compute_dtype=None,
                     tile_n_max=2048, batch_tile=128):
    """Pad/cast the Hypernet weights once and fix the tiling.

    w1 : (D_in, H)   first_linear.weight.T (bias=False)
    b1 : (H,)        first_bias
    w2 : (H, D_out)  linear_layers[0].weight.T
    b2 : (D_out,)    linear_layers[0].bias
    """
    w1 = jnp.asarray(w1)
    b1 = jnp.asarray(b1)
    w2 = jnp.asarray(w2)
    b2 = jnp.asarray(b2)
    d_in, H = w1.shape
    d_out = w2.shape[1]
    param_sizes = tuple(int(s) for s in param_sizes)
    if sum(param_sizes) != d_out:
        raise ValueError(
            f"sum(param_sizes)={sum(param_sizes)} must equal w2.shape[1]={d_out}")

    if compute_dtype is None:
        compute_dtype = w2.dtype
    compute_dtype = jnp.dtype(compute_dtype)
    w_item = compute_dtype.itemsize
    batch_sublane = max(8, 32 // max(w_item, 1))          # 8 for f32, 16 for bf16

    din_p = _round_up(d_in, 128)
    h_p = _round_up(H, 128)

    budget = _vmem_budget_bytes()
    tile_b_cap = max(batch_sublane, _round_up(min(int(batch_tile), 256), batch_sublane))

    # Column-tile width: biggest multiple of 128 whose double-buffered per-step footprint
    # (W2 tile + b2 tile + out tile + hidden block) fits the generation-aware VMEM budget.
    per_col = 2 * (h_p * w_item + 4 + tile_b_cap * 4)
    fixed = 2 * tile_b_cap * h_p * w_item + (2 << 20)
    max_cols = max(128, (budget - fixed) // per_col)
    tile_n_cap = max(128, min(int(tile_n_max), (max_cols // 128) * 128))

    T = _cdiv(d_out, 128)                  # D_out measured in 128-lane units
    k = max(1, min(tile_n_cap // 128, T))
    n_tiles = _cdiv(T, k)
    if n_tiles == 1 and T >= 2:
        n_tiles = 2                        # give both v7x TCs work; harmless on 1-TC chips
    k = _cdiv(T, n_tiles)
    n_tiles = _cdiv(T, k)
    tile_n = k * 128
    dout_p = n_tiles * tile_n              # pad only to the tightest uniform tiling

    params = dict(
        w1=_pad_cast(w1, (din_p, h_p), compute_dtype),
        b1=_pad_cast(jnp.reshape(b1, (1, H)), (1, h_p), jnp.float32),
        w2=_pad_cast(w2, (h_p, dout_p), compute_dtype),
        b2=_pad_cast(jnp.reshape(b2, (1, d_out)), (1, dout_p), jnp.float32),
    )
    meta = dict(
        d_in=int(d_in), hidden=int(H), d_out=int(d_out),
        din_p=int(din_p), h_p=int(h_p), dout_p=int(dout_p),
        tile_n=int(tile_n), n_tiles=int(n_tiles),
        tile_b_cap=int(tile_b_cap), batch_sublane=int(batch_sublane),
        compute_dtype=compute_dtype, param_sizes=param_sizes,
        vmem_budget=int(budget),
    )
    return dict(params=params, meta=meta)


# --------------------------------------------------------------------------------------
# Forward
# --------------------------------------------------------------------------------------
def hypernet_forward(x, prepared):
    """Hypernet forward.  x: (B, D_in).  Returns tuple of (B, s) arrays per param_sizes."""
    p = prepared["params"]
    m = prepared["meta"]
    cd = m["compute_dtype"]

    B, d_in = x.shape
    if d_in != m["d_in"]:
        raise ValueError(f"x.shape[1]={d_in} does not match prepared d_in={m['d_in']}")
    out_dtype = x.dtype

    din_p, h_p, dout_p = m["din_p"], m["h_p"], m["dout_p"]
    tile_n, n_tiles = m["tile_n"], m["n_tiles"]
    budget = m["vmem_budget"]
    w_item = jnp.dtype(cd).itemsize
    o_item = jnp.dtype(out_dtype).itemsize

    # Batch tiling (bounds output-block / vreg pressure for large B).
    b_p = _round_up(B, m["batch_sublane"])
    tile_b = min(b_p, m["tile_b_cap"])
    b_p = _round_up(b_p, tile_b)
    n_b = b_p // tile_b

    xp = x.astype(cd)
    if xp.shape != (b_p, din_p):
        xp = jnp.zeros((b_p, din_p), cd).at[:B, :d_in].set(xp)

    # ---- prologue: hidden = tanh(b1 + x @ W1), computed once (not per output tile) ----
    vmem1 = (2 * (tile_b * din_p + tile_b * h_p) * w_item
             + 2 * din_p * h_p * w_item + 2 * h_p * 4 + (2 << 20))
    vmem1 = int(min(max(vmem1, 32 << 20), budget))
    hidden = pl.pallas_call(
        _hidden_kernel,
        out_shape=jax.ShapeDtypeStruct((b_p, h_p), cd),
        grid=(n_b,),
        in_specs=[
            pl.BlockSpec((tile_b, din_p), lambda i: (i, 0)),   # x batch tile
            pl.BlockSpec((din_p, h_p), lambda i: (0, 0)),      # W1 (replicated)
            pl.BlockSpec((1, h_p), lambda i: (0, 0)),          # b1 (replicated, f32)
        ],
        out_specs=pl.BlockSpec((tile_b, h_p), lambda i: (i, 0)),
        compiler_params=pltpu.CompilerParams(
            dimension_semantics=("parallel",),
            vmem_limit_bytes=vmem1,
        ),
        cost_estimate=pl.CostEstimate(
            flops=2 * b_p * din_p * h_p,
            transcendentals=b_p * h_p,
            bytes_accessed=(b_p * din_p + din_p * h_p + b_p * h_p) * w_item + h_p * 4,
        ),
    )(xp, p["w1"], p["b1"])

    # ---- main: out[:, tile] = hidden @ W2[:, tile] + b2[tile] (lane-dense stores) ----
    vmem2 = (2 * tile_n * (h_p * w_item + 4 + tile_b * o_item)
             + 2 * tile_b * h_p * w_item + (2 << 20))
    vmem2 = int(min(max(vmem2, 32 << 20), budget))
    out_padded = pl.pallas_call(
        _out_tile_kernel,
        out_shape=jax.ShapeDtypeStruct((b_p, dout_p), out_dtype),
        grid=(n_b, n_tiles),
        in_specs=[
            pl.BlockSpec((tile_b, h_p), lambda i, j: (i, 0)),    # hidden batch tile
            pl.BlockSpec((h_p, tile_n), lambda i, j: (0, j)),    # W2 column tile
            pl.BlockSpec((1, tile_n), lambda i, j: (0, j)),      # b2 column tile (f32)
        ],
        out_specs=pl.BlockSpec((tile_b, tile_n), lambda i, j: (i, j)),
        compiler_params=pltpu.CompilerParams(
            dimension_semantics=("parallel", "parallel"),  # v7x: tiles split across TCs
            vmem_limit_bytes=vmem2,
        ),
        cost_estimate=pl.CostEstimate(
            flops=2 * b_p * h_p * dout_p,
            transcendentals=0,
            bytes_accessed=((h_p * dout_p + b_p * h_p) * w_item
                            + dout_p * 4 + b_p * dout_p * o_item),
        ),
    )(hidden, p["w2"], p["b2"])

    # Un-pad once, then split into the parameter tuple (cheap XLA slices).
    out = out_padded[:B, :m["d_out"]]
    params_out, start = [], 0
    for s in m["param_sizes"]:
        params_out.append(out[:, start:start + s])
        start += s
    return tuple(params_out)


# --------------------------------------------------------------------------------------
# Reference (plain XLA) for verification
# --------------------------------------------------------------------------------------
def _reference(x, w1, b1, w2, b2, param_sizes, compute_dtype=jnp.float32):
    cd = jnp.dtype(compute_dtype)
    h = jnp.dot(x.astype(cd), w1.astype(cd), preferred_element_type=jnp.float32)
    h = jnp.tanh(h + jnp.reshape(b1, (1, -1)).astype(jnp.float32))
    o = jnp.dot(h.astype(cd), w2.astype(cd), preferred_element_type=jnp.float32)
    o = (o + jnp.reshape(b2, (1, -1)).astype(jnp.float32)).astype(x.dtype)
    out, start = [], 0
    for s in param_sizes:
        out.append(o[:, start:start + s])
        start += s
    return tuple(out)


if __name__ == "__main__":
    # Shapes consistent with Hypernet(input_size=16, hidden_sizes=[32], param_sizes=[4,4,4]).
    B = 2
    input_size = 16
    hidden = 32
    param_sizes = [4, 4, 4]
    output_size = sum(param_sizes)

    key = jax.random.PRNGKey(0)
    kx, kw1, kb1, kw2, kb2 = jax.random.split(key, 5)

    # Deterministic init mirroring Hypernet.__init__ / reset_parameters:
    #   first_bias ~ U(-0.1, 0.1), first_linear.weight ~ N(0,1) (bias=False),
    #   linear_layers[0].weight ~ N(0,1), its bias ~ U(-1/sqrt(H), 1/sqrt(H)).
    x = jax.random.normal(kx, (B, input_size), dtype=jnp.float32)
    w1 = jax.random.normal(kw1, (input_size, hidden), dtype=jnp.float32)      # (D_in, H)
    b1 = jax.random.uniform(kb1, (hidden,), minval=-0.1, maxval=0.1, dtype=jnp.float32)
    w2 = jax.random.normal(kw2, (hidden, output_size), dtype=jnp.float32)     # (H, D_out)
    bound = 1.0 / float(hidden) ** 0.5
    b2 = jax.random.uniform(kb2, (output_size,), minval=-bound, maxval=bound,
                            dtype=jnp.float32)

    # f32 path: bit-faithful to the PyTorch module.
    prep_f32 = prepare_hypernet(w1, b1, w2, b2, param_sizes, compute_dtype=jnp.float32)
    out_f32 = jax.block_until_ready(hypernet_forward(x, prep_f32))
    ref_f32 = _reference(x, w1, b1, w2, b2, param_sizes, jnp.float32)
    for o, r in zip(out_f32, ref_f32):
        assert o.shape == r.shape, (o.shape, r.shape)
        assert jnp.allclose(o, r, atol=1e-4, rtol=1e-4), "f32 mismatch vs reference"

    # bf16 weights through the MXU with f32 accumulation (recommended fast path).
    prep_bf16 = prepare_hypernet(w1, b1, w2, b2, param_sizes, compute_dtype=jnp.bfloat16)
    out_bf16 = jax.block_until_ready(hypernet_forward(x, prep_bf16))
    ref_bf16 = _reference(x, w1, b1, w2, b2, param_sizes, jnp.bfloat16)
    for o, r in zip(out_bf16, ref_bf16):
        assert o.shape == r.shape, (o.shape, r.shape)
        assert jnp.allclose(o, r, atol=3e-2, rtol=3e-2), "bf16 mismatch vs bf16 reference"

    print("KERNEL_OK")
</pallas_src>

<mosaic_0001>
module attributes {stable_mosaic.version = 11 : i64} {
  func.func @_hidden_kernel(%arg0: i32, %arg1: memref<8x128xf32, #tpu.memory_space<vmem>>, %arg2: memref<128x128xf32, #tpu.memory_space<vmem>>, %arg3: memref<1x128xf32, #tpu.memory_space<vmem>>, %arg4: memref<8x128xf32, #tpu.memory_space<vmem>>) attributes {dimension_semantics = [#tpu.dimension_semantics<parallel>], iteration_bounds = array<i64: 1>, scalar_prefetch = 0 : i64, scratch_operands = 0 : i64, tpu.core_type = #tpu.core_type<tc>, window_params = [{transform_indices = @transform_0, window_bounds = array<i64: 8, 128>}, {pipeline_mode = #tpu.pipeline_mode<synchronous>, transform_indices = @transform_1, window_bounds = array<i64: 128, 128>}, {pipeline_mode = #tpu.pipeline_mode<synchronous>, transform_indices = @transform_2, window_bounds = array<i64: 1, 128>}, {transform_indices = @transform_3, window_bounds = array<i64: 8, 128>}]} {
    %c0 = arith.constant 0 : index
    %c0_0 = arith.constant 0 : index
    %0 = vector.load %arg1[%c0, %c0_0] : memref<8x128xf32, #tpu.memory_space<vmem>>, vector<8x128xf32>
    %c0_1 = arith.constant 0 : index
    %c0_2 = arith.constant 0 : index
    %1 = vector.load %arg2[%c0_1, %c0_2] : memref<128x128xf32, #tpu.memory_space<vmem>>, vector<128x128xf32>
    %cst = arith.constant dense<0.000000e+00> : vector<8x128xf32>
    %2 = tpu.matmul %0, %1, %cst {dimension_numbers = #tpu.dot_dimension_numbers<[1], [0], [0], [1], [0, 0, 1, 1], [], []>} : vector<8x128xf32>, vector<128x128xf32>, vector<8x128xf32> -> vector<8x128xf32>
    %c0_3 = arith.constant 0 : index
    %c0_4 = arith.constant 0 : index
    %3 = vector.load %arg3[%c0_3, %c0_4] : memref<1x128xf32, #tpu.memory_space<vmem>>, vector<1x128xf32>
    %4 = vector.broadcast %3 : vector<1x128xf32> to vector<8x128xf32>
    %5 = arith.addf %2, %4 : vector<8x128xf32>
    %6 = math.tanh %5 : vector<8x128xf32>
    %c0_5 = arith.constant 0 : index
    %c0_6 = arith.constant 0 : index
    %7 = vector.load %arg4[%c0_5, %c0_6] : memref<8x128xf32, #tpu.memory_space<vmem>>, vector<8x128xf32>
    tpu.vector_store %arg4[%c0_5, %c0_6], %6 {strides = array<i32>} : memref<8x128xf32, #tpu.memory_space<vmem>>, vector<8x128xf32>,
    return
  }
  func.func @transform_0(%arg0: i32) -> (i32, i32) {
    %c0_i32 = arith.constant 0 : i32
    %c0_i32_0 = arith.constant 0 : i32
    return %arg0, %c0_i32 : i32, i32
  }
  func.func @transform_1(%arg0: i32) -> (i32, i32) {
    %c0_i32 = arith.constant 0 : i32
    %c0_i32_0 = arith.constant 0 : i32
    %c0_i32_1 = arith.constant 0 : i32
    return %c0_i32, %c0_i32_0 : i32, i32
  }
  func.func @transform_2(%arg0: i32) -> (i32, i32) {
    %c0_i32 = arith.constant 0 : i32
    %c0_i32_0 = arith.constant 0 : i32
    %c0_i32_1 = arith.constant 0 : i32
    return %c0_i32, %c0_i32_0 : i32, i32
  }
  func.func @transform_3(%arg0: i32) -> (i32, i32) {
    %c0_i32 = arith.constant 0 : i32
    %c0_i32_0 = arith.constant 0 : i32
    return %arg0, %c0_i32 : i32, i32
  }
}

</mosaic_0001>

<llo_original>
// kernel: tpu_custom_call.1
$region0: #{tpu_custom_call.1}
  #allocation0 [shape = 'u32[]', space=smem, size = 0x4, offset = 0x4, fixed_abs, tag = 'smem constant byte address 0x4 - core index']
  #allocation1 [shape = 'u32[72,128]{1,0:T(1,128)}', space=vmem, size = 0x9000, scoped, tag = 'internal scratch']
  %s0 = inlined_call_operand.hbm [shape: f32[8,128], index: 0, kind: input, shape index: {}]
  %s1 = inlined_call_operand.hbm [shape: f32[128,128], index: 1, kind: input, shape index: {}]
  %s2 = inlined_call_operand.vmem [shape: f32[1,128], index: 2, kind: input, shape index: {}]
  %s3 = inlined_call_operand.hbm [shape: f32[8,128], index: 3, kind: output, shape index: {}]
  %s4 = sld [smem:[#allocation0]]
  $region30: #{tpu_custom_call.1} parent=0
    _
  %s6 = ssub.s32 1, %s4
  %s7 = scalar_select 0, %s6, %s4
  $region1: #{tpu_custom_call.1} parent=0
    #allocation2 [shape = 'u8[4096]{0}', space=vmem, size = 0x1000, scoped, tag = 'input window, operand 0, single buffered']
    #allocation3 [shape = 's32[1]{0}', space=sflag, size = 0x4, scoped, tag = 'scoped memory for tpu_custom_call.1']
    #allocation4 [shape = 's32[1]{0}', space=sflag, size = 0x4, scoped, tag = 'scoped memory for tpu_custom_call.1']
    #allocation5 [shape = 'u8[65536]{0}', space=vmem, size = 0x10000, scoped, tag = 'input window, operand 1, single buffered']
    #allocation6 [shape = 's32[1]{0}', space=sflag, size = 0x4, scoped, tag = 'scoped memory for tpu_custom_call.1']
    #allocation7 [shape = 'u8[4096]{0}', space=vmem, size = 0x1000, scoped, tag = 'output window, operand 0, single buffered']
    %8 = vsyncpa [#allocation3], 0
    %9 = vsyncpa [#allocation6], 0
    %10 = vsyncpa [#allocation4], 0
    // Predicated region
    $region2: #{tpu_custom_call.1} parent=1 // pred_check
      _
    $region3: #{tpu_custom_call.1} parent=1 // pred_check_branch
      %12 = sbr.rel (0) target = $region5
    $region4: #{tpu_custom_call.1} parent=1 // pred_region
      %14 = vsyncadd [#allocation3], 0
      %s16 = sshll.u32 %s0, 4
      %s17 = int_to_ptr.hbm [resolvable:$true] %s16
      %s18 = sshll.u32 [#allocation2], 4
      %s19 = int_to_ptr.vmem [resolvable:$true] %s18
      %21 = dma.hbm_to_vmem [thread:$0]  %s17, 128, %s19, [#allocation3]
    $region5: #{tpu_custom_call.1} parent=1 // pred_fallthru
      _
    // Predicated region
    $region6: #{tpu_custom_call.1} parent=1 // pred_check
      _
    $region7: #{tpu_custom_call.1} parent=1 // pred_check_branch
      %23 = sbr.rel (0) target = $region9
    $region8: #{tpu_custom_call.1} parent=1 // pred_region
      %25 = vsyncadd [#allocation6], 0
      %s26 = sshll.u32 %s1, 4
      %s27 = int_to_ptr.hbm [resolvable:$true] %s26
      %s28 = sshll.u32 [#allocation5], 4
      %s29 = int_to_ptr.vmem [resolvable:$true] %s28
      %34 = dma.hbm_to_vmem [thread:$0]  %s27, 2048, %s29, [#allocation6], 128, 128, 8
    $region9: #{tpu_custom_call.1} parent=1 // pred_fallthru
      _
    // Predicated region
    $region10: #{tpu_custom_call.1} parent=1 // pred_check
      _
    $region11: #{tpu_custom_call.1} parent=1 // pred_check_branch
      %36 = sbr.rel (0) target = $region13
    $region12: #{tpu_custom_call.1} parent=1 // pred_region
      _
    $region13: #{tpu_custom_call.1} parent=1 // pred_fallthru
      _
    // Predicated region
    $region14: #{tpu_custom_call.1} parent=1 // pred_check
      _
    $region15: #{tpu_custom_call.1} parent=1 // pred_check_branch
      %38 = sbr.rel (0) target = $region17
    $region16: #{tpu_custom_call.1} parent=1 // pred_region
      %40 = dma.done [#allocation3], 128
    $region17: #{tpu_custom_call.1} parent=1 // pred_fallthru
      _
    // Predicated region
    $region18: #{tpu_custom_call.1} parent=1 // pred_check
      _
    $region19: #{tpu_custom_call.1} parent=1 // pred_check_branch
      %42 = sbr.rel (0) target = $region21
    $region20: #{tpu_custom_call.1} parent=1 // pred_region
      %44 = dma.done [#allocation6], 2048
    $region21: #{tpu_custom_call.1} parent=1 // pred_fallthru
      _
    %v45 = vld [vmem:[#allocation2] sm:$0xff]
    %v46 = vld [vmem:[#allocation5] sm:$0xff]
    %v47 = vld [vmem:[#allocation5 + $0x8] sm:$0xff]
    %v48 = vld [vmem:[#allocation5 + $0x10] sm:$0xff]
    %v49 = vld [vmem:[#allocation5 + $0x18] sm:$0xff]
    %v50 = vld [vmem:[#allocation5 + $0x20] sm:$0xff]
    %v51 = vld [vmem:[#allocation5 + $0x28] sm:$0xff]
    %v52 = vld [vmem:[#allocation5 + $0x30] sm:$0xff]
    %v53 = vld [vmem:[#allocation5 + $0x38] sm:$0xff]
    %v54 = vld [vmem:[#allocation5 + $0x40] sm:$0xff]
    %v55 = vld [vmem:[#allocation5 + $0x48] sm:$0xff]
    %v56 = vld [vmem:[#allocation5 + $0x50] sm:$0xff]
    %v57 = vld [vmem:[#allocation5 + $0x58] sm:$0xff]
    %v58 = vld [vmem:[#allocation5 + $0x60] sm:$0xff]
    %v59 = vld [vmem:[#allocation5 + $0x68] sm:$0xff]
    %v60 = vld [vmem:[#allocation5 + $0x70] sm:$0xff]
    %v61 = vld [vmem:[#allocation5 + $0x78] sm:$0xff]
    %v62 = vld [vmem:[%s2] sm:$0x1]
    %v64 = vperm.slane %v62, 0
    %66 = vmatpush.msra.mxu0 %v61
    %67 = vmatpush.msra.mxu0 %v60
    %68 = vmatpush.msra.mxu0 %v59
    %69 = vmatpush.msra.mxu0 %v58
    %70 = vmatpush.msra.mxu0 %v57
    %71 = vmatpush.msra.mxu0 %v56
    %72 = vmatpush.msra.mxu0 %v55
    %73 = vmatpush.msra.mxu0 %v54
    %74 = vmatpush.msra.mxu0 %v53
    %75 = vmatpush.msra.mxu0 %v52
    %76 = vmatpush.msra.mxu0 %v51
    %77 = vmatpush.msra.mxu0 %v50
    %78 = vmatpush.msra.mxu0 %v49
    %79 = vmatpush.msra.mxu0 %v48
    %80 = vmatpush.msra.mxu0 %v47
    %81 = vmatpush.msra.mxu0 %v46
    %82 = vmatmul.f32.gmra.mxu0 %v45
    %v83 = vpop.f32.mrf.mxu0
    %v84 = vadd.f32 %v64, %v83
    %85 = vdwg.mxu0
    %v86 = vtanh.pop %v84
    %87 = vst [vmem:[#allocation7] sm:$0xff] %v86
    // Predicated region
    $region22: #{tpu_custom_call.1} parent=1 // pred_check
      _
    $region23: #{tpu_custom_call.1} parent=1 // pred_check_branch
      %89 = sbr.rel (0) target = $region25
    $region24: #{tpu_custom_call.1} parent=1 // pred_region
      %91 = vsyncadd [#allocation4], 0
      %s93 = sshll.u32 [#allocation7], 4
      %s94 = int_to_ptr.vmem [resolvable:$true] %s93
      %s95 = sshll.u32 %s3, 4
      %s96 = int_to_ptr.hbm [resolvable:$true] %s95
      %98 = dma.vmem_to_hbm [thread:$0]  %s94, 128, %s96, [#allocation4]
    $region25: #{tpu_custom_call.1} parent=1 // pred_fallthru
      _
    // Predicated region
    $region26: #{tpu_custom_call.1} parent=1 // pred_check
      _
    $region27: #{tpu_custom_call.1} parent=1 // pred_check_branch
      %100 = sbr.rel (0) target = $region29
    $region28: #{tpu_custom_call.1} parent=1 // pred_region
      %102 = dma.done [#allocation4], 128
    $region29: #{tpu_custom_call.1} parent=1 // pred_fallthru
      _
    %103 = vsyncpa [#allocation3], 1
    %104 = vsyncpa [#allocation6], 1
    %105 = vsyncpa [#allocation4], 1

</llo_original>
